<compile_context>
chip_gen: v7x
topology: tpu7x:2x2x1
jax: 0.10.0
libtpu: 0.0.40
codegen_flags: <defaults>
</compile_context>

<pallas_src>
import functools

import jax
import jax.numpy as jnp
from jax.experimental import pallas as pl
from jax.experimental.pallas import tpu as pltpu


def _round_up(x, m):
    return ((x + m - 1) // m) * m


def _actor_critic_kernel(state_ref, w1_ref, b1_ref, w2_ref, b2_ref,
                         wh_ref, bh_ref, out_ref, *, n_actions):
    s = state_ref[...]                                              # (TB, HW) int32

    # one-hot(state) laid out [v*HW + p] along lanes; each (TB, HW) slab is a
    # multiple of 128 lanes so the concat is pure lane placement (no XLU work).
    oh = jnp.concatenate(
        [(s == v).astype(jnp.float32) for v in range(4)], axis=-1)  # (TB, 4*HW)

    # shared MLP (embedding pre-folded into w1): Linear -> ReLU -> Linear
    h1 = jnp.dot(oh, w1_ref[...], preferred_element_type=jnp.float32) + b1_ref[...]
    h1 = jnp.maximum(h1, 0.0)
    feat = jnp.dot(h1, w2_ref[...], preferred_element_type=jnp.float32) + b2_ref[...]

    # fused actor+critic head: columns [0, n_actions) are actor logits,
    # column n_actions is the critic value, columns above are zero padding.
    head = jnp.dot(feat, wh_ref[...], preferred_element_type=jnp.float32) + bh_ref[...]
    col = jax.lax.broadcasted_iota(jnp.int32, head.shape, 1)
    is_act = col < n_actions
    masked = jnp.where(is_act, head, jnp.float32(-1e30))
    m = jnp.max(masked, axis=-1, keepdims=True)
    e = jnp.exp(masked - m)                        # non-action cols underflow to 0
    probs = e / jnp.sum(e, axis=-1, keepdims=True)  # exact div (tolerance-safe)
    out_ref[...] = jnp.where(is_act, probs, head)   # value + padding pass through


@functools.partial(jax.jit, static_argnames=("n_actions",))
def actor_critic_forward(state, params, n_actions):
    """state: (B, H, W) int32 in [0,4). Returns (action_probs (B, n_actions), value (B, 1))."""
    B, H, W = state.shape
    HW = H * W
    E = params["embedding"].shape[1]
    D = params["w1"].shape[1]
    Dp = _round_up(D, 128)                       # lane-dense hidden width (zero-pad, exact)
    A1 = n_actions + 1
    A1p = _round_up(A1, 128)                     # lane-dense head/output width

    # ---- parameter prep (tiny; runs as plain XLA outside the kernel) ----
    w1r = params["w1"].reshape(HW, E, D)
    w1f = jnp.einsum("ve,ped->vpd", params["embedding"], w1r).reshape(4 * HW, D)
    w1f = jnp.pad(w1f, ((0, 0), (0, Dp - D)))
    b1 = jnp.pad(params["b1"], ((0, 0), (0, Dp - D)))
    w2 = jnp.pad(params["w2"], ((0, Dp - D), (0, Dp - D)))
    b2 = jnp.pad(params["b2"], ((0, 0), (0, Dp - D)))
    wh = jnp.pad(jnp.concatenate([params["wa"], params["wc"]], axis=1),
                 ((0, Dp - D), (0, A1p - A1)))                       # (Dp, A1p)
    bh = jnp.pad(jnp.concatenate([params["ba"], params["bc"]], axis=1),
                 ((0, 0), (0, A1p - A1)))                            # (1,  A1p)

    # ---- batch tiling ----
    state2d = state.reshape(B, HW).astype(jnp.int32)
    TB = min(512, _round_up(B, 8))               # safe for 16 MiB scoped VMEM (v5e)
    B_pad = _round_up(B, TB)
    if B_pad != B:
        state2d = jnp.pad(state2d, ((0, B_pad - B), (0, 0)))  # pad rows = token 0
    grid = (B_pad // TB,)

    weight_args = (w1f, b1, w2, b2, wh, bh)

    flops = 2 * B_pad * (4 * HW * Dp + Dp * Dp + Dp * A1p)
    bytes_accessed = (B_pad * HW * 4
                      + sum(int(a.size) * 4 for a in weight_args)
                      + B_pad * A1p * 4)

    head_out = pl.pallas_call(
        functools.partial(_actor_critic_kernel, n_actions=n_actions),
        out_shape=jax.ShapeDtypeStruct((B_pad, A1p), jnp.float32),
        grid=grid,
        in_specs=[pl.BlockSpec((TB, HW), lambda i: (i, 0))] +        # batch tile
                 [pl.BlockSpec(a.shape, lambda i: (0, 0))            # resident weights
                  for a in weight_args],
        out_specs=pl.BlockSpec((TB, A1p), lambda i: (i, 0)),
        compiler_params=pltpu.CompilerParams(
            dimension_semantics=("parallel",),                       # v7x megacore
        ),
        cost_estimate=pl.CostEstimate(
            flops=int(flops),
            transcendentals=int(B_pad * A1p),
            bytes_accessed=int(bytes_accessed),
        ),
    )(state2d, *weight_args)

    head_out = head_out[:B]
    return head_out[:, :n_actions], head_out[:, n_actions:n_actions + 1]


def init_params(key, input_dim, n_actions, embedding_dim=8, output_dim=64):
    """Deterministic parameter init matching the PyTorch module's shapes."""
    ks = jax.random.split(key, 5)
    flat_in = embedding_dim * input_dim * input_dim

    def lin(k, fan_in, fan_out):
        bound = 1.0 / jnp.sqrt(fan_in)
        kw, kb = jax.random.split(k)
        w = jax.random.uniform(kw, (fan_in, fan_out), jnp.float32, -bound, bound)
        b = jax.random.uniform(kb, (1, fan_out), jnp.float32, -bound, bound)
        return w, b

    w1, b1 = lin(ks[1], flat_in, output_dim)
    w2, b2 = lin(ks[2], output_dim, output_dim)
    wa, ba = lin(ks[3], output_dim, n_actions)
    wc, bc = lin(ks[4], output_dim, 1)

    return {
        "embedding": jax.random.normal(ks[0], (4, embedding_dim), jnp.float32),
        "w1": w1, "b1": b1,
        "w2": w2, "b2": b2,
        "wa": wa, "ba": ba,
        "wc": wc, "bc": bc,
    }


def _reference_forward(state, params):
    """Pure-JAX reference of the PyTorch forward (gather + flatten + MLP)."""
    x = jnp.take(params["embedding"], state, axis=0)
    x = x.reshape(x.shape[0], -1)
    h1 = jnp.maximum(x @ params["w1"] + params["b1"], 0.0)
    feat = h1 @ params["w2"] + params["b2"]
    logits = feat @ params["wa"] + params["ba"]
    probs = jax.nn.softmax(logits, axis=-1)
    value = feat @ params["wc"] + params["bc"]
    return probs, value


if __name__ == "__main__":
    B, INPUT_DIM, N_ACTIONS = 2, 16, 6
    EMBEDDING_DIM, OUTPUT_DIM = 8, 64

    key = jax.random.PRNGKey(0)
    k_state, k_params = jax.random.split(key)

    state = jax.random.randint(k_state, (B, INPUT_DIM, INPUT_DIM), 0, 4, dtype=jnp.int32)
    params = init_params(k_params, INPUT_DIM, N_ACTIONS, EMBEDDING_DIM, OUTPUT_DIM)

    probs, value = actor_critic_forward(state, params, N_ACTIONS)
    jax.block_until_ready((probs, value))

    ref_probs, ref_value = _reference_forward(state, params)
    assert probs.shape == (B, N_ACTIONS) and value.shape == (B, 1)
    # Embedding-fold reassociates the K=2048 sum in f32; allow a small slack.
    assert jnp.allclose(probs, ref_probs, atol=1e-4, rtol=1e-4)
    assert jnp.allclose(value, ref_value, atol=1e-4, rtol=1e-4)
    assert jnp.allclose(jnp.sum(probs, axis=-1), 1.0, atol=1e-5)

    print("KERNEL_OK")
</pallas_src>

<mosaic_0001>
module attributes {stable_mosaic.version = 11 : i64} {
  func.func @_actor_critic_kernel(%arg0: i32, %arg1: memref<8x256xi32, #tpu.memory_space<vmem>>, %arg2: memref<1024x128xf32, #tpu.memory_space<vmem>>, %arg3: memref<1x128xf32, #tpu.memory_space<vmem>>, %arg4: memref<128x128xf32, #tpu.memory_space<vmem>>, %arg5: memref<1x128xf32, #tpu.memory_space<vmem>>, %arg6: memref<128x128xf32, #tpu.memory_space<vmem>>, %arg7: memref<1x128xf32, #tpu.memory_space<vmem>>, %arg8: memref<8x128xf32, #tpu.memory_space<vmem>>) attributes {dimension_semantics = [#tpu.dimension_semantics<parallel>], iteration_bounds = array<i64: 1>, scalar_prefetch = 0 : i64, scratch_operands = 0 : i64, tpu.core_type = #tpu.core_type<tc>, window_params = [{transform_indices = @transform_0, window_bounds = array<i64: 8, 256>}, {pipeline_mode = #tpu.pipeline_mode<synchronous>, transform_indices = @transform_1, window_bounds = array<i64: 1024, 128>}, {pipeline_mode = #tpu.pipeline_mode<synchronous>, transform_indices = @transform_2, window_bounds = array<i64: 1, 128>}, {pipeline_mode = #tpu.pipeline_mode<synchronous>, transform_indices = @transform_3, window_bounds = array<i64: 128, 128>}, {pipeline_mode = #tpu.pipeline_mode<synchronous>, transform_indices = @transform_4, window_bounds = array<i64: 1, 128>}, {pipeline_mode = #tpu.pipeline_mode<synchronous>, transform_indices = @transform_5, window_bounds = array<i64: 128, 128>}, {pipeline_mode = #tpu.pipeline_mode<synchronous>, transform_indices = @transform_6, window_bounds = array<i64: 1, 128>}, {transform_indices = @transform_7, window_bounds = array<i64: 8, 128>}]} {
    %c0 = arith.constant 0 : index
    %c0_0 = arith.constant 0 : index
    %0 = vector.load %arg1[%c0, %c0_0] : memref<8x256xi32, #tpu.memory_space<vmem>>, vector<8x256xi32>
    %c0_i32 = arith.constant 0 : i32
    %1 = vector.broadcast %c0_i32 : i32 to vector<8x256xi32>
    %2 = arith.cmpi eq, %0, %1 : vector<8x256xi32>
    %3 = arith.extui %2 : vector<8x256xi1> to vector<8x256xi32>
    %4 = arith.sitofp %3 : vector<8x256xi32> to vector<8x256xf32>
    %c1_i32 = arith.constant 1 : i32
    %5 = vector.broadcast %c1_i32 : i32 to vector<8x256xi32>
    %6 = arith.cmpi eq, %0, %5 : vector<8x256xi32>
    %7 = arith.extui %6 : vector<8x256xi1> to vector<8x256xi32>
    %8 = arith.sitofp %7 : vector<8x256xi32> to vector<8x256xf32>
    %c2_i32 = arith.constant 2 : i32
    %9 = vector.broadcast %c2_i32 : i32 to vector<8x256xi32>
    %10 = arith.cmpi eq, %0, %9 : vector<8x256xi32>
    %11 = arith.extui %10 : vector<8x256xi1> to vector<8x256xi32>
    %12 = arith.sitofp %11 : vector<8x256xi32> to vector<8x256xf32>
    %c3_i32 = arith.constant 3 : i32
    %13 = vector.broadcast %c3_i32 : i32 to vector<8x256xi32>
    %14 = arith.cmpi eq, %0, %13 : vector<8x256xi32>
    %15 = arith.extui %14 : vector<8x256xi1> to vector<8x256xi32>
    %16 = arith.sitofp %15 : vector<8x256xi32> to vector<8x256xf32>
    %17 = tpu.concatenate %4, %8, %12, %16 in 1 : vector<8x256xf32>, vector<8x256xf32>, vector<8x256xf32>, vector<8x256xf32> -> vector<8x1024xf32>
    %c0_1 = arith.constant 0 : index
    %c0_2 = arith.constant 0 : index
    %18 = vector.load %arg2[%c0_1, %c0_2] : memref<1024x128xf32, #tpu.memory_space<vmem>>, vector<1024x128xf32>
    %cst = arith.constant dense<0.000000e+00> : vector<8x128xf32>
    %19 = tpu.matmul %17, %18, %cst {dimension_numbers = #tpu.dot_dimension_numbers<[1], [0], [0], [1], [0, 0, 1, 1], [], []>} : vector<8x1024xf32>, vector<1024x128xf32>, vector<8x128xf32> -> vector<8x128xf32>
    %c0_3 = arith.constant 0 : index
    %c0_4 = arith.constant 0 : index
    %20 = vector.load %arg3[%c0_3, %c0_4] : memref<1x128xf32, #tpu.memory_space<vmem>>, vector<1x128xf32>
    %21 = vector.broadcast %20 : vector<1x128xf32> to vector<8x128xf32>
    %22 = arith.addf %19, %21 : vector<8x128xf32>
    %cst_5 = arith.constant 0.000000e+00 : f32
    %23 = vector.broadcast %cst_5 : f32 to vector<8x128xf32>
    %24 = arith.maximumf %22, %23 : vector<8x128xf32>
    %c0_6 = arith.constant 0 : index
    %c0_7 = arith.constant 0 : index
    %25 = vector.load %arg4[%c0_6, %c0_7] : memref<128x128xf32, #tpu.memory_space<vmem>>, vector<128x128xf32>
    %cst_8 = arith.constant dense<0.000000e+00> : vector<8x128xf32>
    %26 = tpu.matmul %24, %25, %cst_8 {dimension_numbers = #tpu.dot_dimension_numbers<[1], [0], [0], [1], [0, 0, 1, 1], [], []>} : vector<8x128xf32>, vector<128x128xf32>, vector<8x128xf32> -> vector<8x128xf32>
    %c0_9 = arith.constant 0 : index
    %c0_10 = arith.constant 0 : index
    %27 = vector.load %arg5[%c0_9, %c0_10] : memref<1x128xf32, #tpu.memory_space<vmem>>, vector<1x128xf32>
    %28 = vector.broadcast %27 : vector<1x128xf32> to vector<8x128xf32>
    %29 = arith.addf %26, %28 : vector<8x128xf32>
    %c0_11 = arith.constant 0 : index
    %c0_12 = arith.constant 0 : index
    %30 = vector.load %arg6[%c0_11, %c0_12] : memref<128x128xf32, #tpu.memory_space<vmem>>, vector<128x128xf32>
    %cst_13 = arith.constant dense<0.000000e+00> : vector<8x128xf32>
    %31 = tpu.matmul %29, %30, %cst_13 {dimension_numbers = #tpu.dot_dimension_numbers<[1], [0], [0], [1], [0, 0, 1, 1], [], []>} : vector<8x128xf32>, vector<128x128xf32>, vector<8x128xf32> -> vector<8x128xf32>
    %c0_14 = arith.constant 0 : index
    %c0_15 = arith.constant 0 : index
    %32 = vector.load %arg7[%c0_14, %c0_15] : memref<1x128xf32, #tpu.memory_space<vmem>>, vector<1x128xf32>
    %33 = vector.broadcast %32 : vector<1x128xf32> to vector<8x128xf32>
    %34 = arith.addf %31, %33 : vector<8x128xf32>
    %35 = tpu.iota {dimensions = array<i32: 1>} : vector<8x128xi32>
    %c6_i32 = arith.constant 6 : i32
    %36 = vector.broadcast %c6_i32 : i32 to vector<8x128xi32>
    %37 = arith.cmpi slt, %35, %36 : vector<8x128xi32>
    %cst_16 = arith.constant -1.000000e+30 : f32
    %38 = vector.broadcast %cst_16 : f32 to vector<8x128xf32>
    %39 = arith.select %37, %34, %38 : vector<8x128xi1>, vector<8x128xf32>
    %cst_17 = arith.constant dense<0xFF800000> : vector<8xf32>
    %40 = vector.multi_reduction <maximumf>, %39, %cst_17 [1] : vector<8x128xf32> to vector<8xf32>
    %41 = vector.shape_cast %40 : vector<8xf32> to vector<8x1xf32>
    %42 = vector.broadcast %41 : vector<8x1xf32> to vector<8x128xf32>
    %43 = arith.subf %39, %42 : vector<8x128xf32>
    %44 = math.exp %43 : vector<8x128xf32>
    %cst_18 = arith.constant dense<0.000000e+00> : vector<8xf32>
    %45 = vector.multi_reduction <add>, %44, %cst_18 [1] : vector<8x128xf32> to vector<8xf32>
    %46 = vector.shape_cast %45 : vector<8xf32> to vector<8x1xf32>
    %47 = vector.broadcast %46 : vector<8x1xf32> to vector<8x128xf32>
    %48 = arith.divf %44, %47 : vector<8x128xf32>
    %49 = arith.select %37, %48, %34 : vector<8x128xi1>, vector<8x128xf32>
    %c0_19 = arith.constant 0 : index
    %c0_20 = arith.constant 0 : index
    %50 = vector.load %arg8[%c0_19, %c0_20] : memref<8x128xf32, #tpu.memory_space<vmem>>, vector<8x128xf32>
    tpu.vector_store %arg8[%c0_19, %c0_20], %49 {strides = array<i32>} : memref<8x128xf32, #tpu.memory_space<vmem>>, vector<8x128xf32>,
    return
  }
  func.func @transform_0(%arg0: i32) -> (i32, i32) {
    %c0_i32 = arith.constant 0 : i32
    %c0_i32_0 = arith.constant 0 : i32
    return %arg0, %c0_i32 : i32, i32
  }
  func.func @transform_1(%arg0: i32) -> (i32, i32) {
    %c0_i32 = arith.constant 0 : i32
    %c0_i32_0 = arith.constant 0 : i32
    %c0_i32_1 = arith.constant 0 : i32
    return %c0_i32, %c0_i32_0 : i32, i32
  }
  func.func @transform_2(%arg0: i32) -> (i32, i32) {
    %c0_i32 = arith.constant 0 : i32
    %c0_i32_0 = arith.constant 0 : i32
    %c0_i32_1 = arith.constant 0 : i32
    return %c0_i32, %c0_i32_0 : i32, i32
  }
  func.func @transform_3(%arg0: i32) -> (i32, i32) {
    %c0_i32 = arith.constant 0 : i32
    %c0_i32_0 = arith.constant 0 : i32
    %c0_i32_1 = arith.constant 0 : i32
    return %c0_i32, %c0_i32_0 : i32, i32
  }
  func.func @transform_4(%arg0: i32) -> (i32, i32) {
    %c0_i32 = arith.constant 0 : i32
    %c0_i32_0 = arith.constant 0 : i32
    %c0_i32_1 = arith.constant 0 : i32
    return %c0_i32, %c0_i32_0 : i32, i32
  }
  func.func @transform_5(%arg0: i32) -> (i32, i32) {
    %c0_i32 = arith.constant 0 : i32
    %c0_i32_0 = arith.constant 0 : i32
    %c0_i32_1 = arith.constant 0 : i32
    return %c0_i32, %c0_i32_0 : i32, i32
  }
  func.func @transform_6(%arg0: i32) -> (i32, i32) {
    %c0_i32 = arith.constant 0 : i32
    %c0_i32_0 = arith.constant 0 : i32
    %c0_i32_1 = arith.constant 0 : i32
    return %c0_i32, %c0_i32_0 : i32, i32
  }
  func.func @transform_7(%arg0: i32) -> (i32, i32) {
    %c0_i32 = arith.constant 0 : i32
    %c0_i32_0 = arith.constant 0 : i32
    return %arg0, %c0_i32 : i32, i32
  }
}

</mosaic_0001>

<llo_original>
// kernel: actor_critic_forward.1
$region0: #{actor_critic_forward.1}
  #allocation0 [shape = 'u32[]', space=smem, size = 0x4, offset = 0x4, fixed_abs, tag = 'smem constant byte address 0x4 - core index']
  #allocation1 [shape = 'u32[144,128]{1,0:T(1,128)}', space=vmem, size = 0x12000, scoped, tag = 'internal scratch']
  %s0 = inlined_call_operand.vmem [shape: s32[8,256], index: 0, kind: input, shape index: {}]
  %s1 = inlined_call_operand.vmem [shape: f32[1024,128], index: 1, kind: input, shape index: {}]
  %s2 = inlined_call_operand.vmem [shape: f32[1,128], index: 2, kind: input, shape index: {}]
  %s3 = inlined_call_operand.vmem [shape: f32[128,128], index: 3, kind: input, shape index: {}]
  %s4 = inlined_call_operand.vmem [shape: f32[1,128], index: 4, kind: input, shape index: {}]
  %s5 = inlined_call_operand.vmem [shape: f32[128,128], index: 5, kind: input, shape index: {}]
  %s6 = inlined_call_operand.vmem [shape: f32[1,128], index: 6, kind: input, shape index: {}]
  %s7 = inlined_call_operand.vmem [shape: f32[8,128], index: 7, kind: output, shape index: {}]
  %s8 = sld [smem:[#allocation0]]
  $region38: #{actor_critic_forward.1} parent=0
    _
  %s10 = ssub.s32 1, %s8
  %s11 = scalar_select 0, %s10, %s8
  // Predicated region
  $region2: #{actor_critic_forward.1} parent=0 // pred_check
    _
  $region3: #{actor_critic_forward.1} parent=0 // pred_check_branch
    %13 = sbr.rel (0) target = $region5
  $region4: #{actor_critic_forward.1} parent=0 // pred_region
    _
  $region5: #{actor_critic_forward.1} parent=0 // pred_fallthru
    _
  // Predicated region
  $region6: #{actor_critic_forward.1} parent=0 // pred_check
    _
  $region7: #{actor_critic_forward.1} parent=0 // pred_check_branch
    %15 = sbr.rel (0) target = $region9
  $region8: #{actor_critic_forward.1} parent=0 // pred_region
    _
  $region9: #{actor_critic_forward.1} parent=0 // pred_fallthru
    _
  // Predicated region
  $region10: #{actor_critic_forward.1} parent=0 // pred_check
    _
  $region11: #{actor_critic_forward.1} parent=0 // pred_check_branch
    %17 = sbr.rel (0) target = $region13
  $region12: #{actor_critic_forward.1} parent=0 // pred_region
    _
  $region13: #{actor_critic_forward.1} parent=0 // pred_fallthru
    _
  // Predicated region
  $region14: #{actor_critic_forward.1} parent=0 // pred_check
    _
  $region15: #{actor_critic_forward.1} parent=0 // pred_check_branch
    %19 = sbr.rel (0) target = $region17
  $region16: #{actor_critic_forward.1} parent=0 // pred_region
    _
  $region17: #{actor_critic_forward.1} parent=0 // pred_fallthru
    _
  // Predicated region
  $region18: #{actor_critic_forward.1} parent=0 // pred_check
    _
  $region19: #{actor_critic_forward.1} parent=0 // pred_check_branch
    %21 = sbr.rel (0) target = $region21
  $region20: #{actor_critic_forward.1} parent=0 // pred_region
    _
  $region21: #{actor_critic_forward.1} parent=0 // pred_fallthru
    _
  // Predicated region
  $region22: #{actor_critic_forward.1} parent=0 // pred_check
    _
  $region23: #{actor_critic_forward.1} parent=0 // pred_check_branch
    %23 = sbr.rel (0) target = $region25
  $region24: #{actor_critic_forward.1} parent=0 // pred_region
    _
  $region25: #{actor_critic_forward.1} parent=0 // pred_fallthru
    _
  // Predicated region
  $region26: #{actor_critic_forward.1} parent=0 // pred_check
    _
  $region27: #{actor_critic_forward.1} parent=0 // pred_check_branch
    %25 = sbr.rel (0) target = $region29
  $region28: #{actor_critic_forward.1} parent=0 // pred_region
    _
  $region29: #{actor_critic_forward.1} parent=0 // pred_fallthru
    _
  %v26 = vld [vmem:[%s0] sm:$0xff]
  %v27 = vld [vmem:[%s0 + $0x8] sm:$0xff]
  %vm28 = vcmp.eq.s32.totalorder %v26, 0
  %vm29 = vcmp.eq.s32.totalorder %v27, 0
  %v30 = vsel %vm28, 1, 0
  %v31 = vsel %vm29, 1, 0
  %v32 = vcvt.s32.f32 %v30
  %v33 = vcvt.s32.f32 %v31
  %vm34 = vcmp.eq.s32.totalorder %v26, 1
  %vm35 = vcmp.eq.s32.totalorder %v27, 1
  %v36 = vsel %vm34, 1, 0
  %v37 = vsel %vm35, 1, 0
  %v38 = vcvt.s32.f32 %v36
  %v39 = vcvt.s32.f32 %v37
  %vm40 = vcmp.eq.s32.totalorder %v26, 2
  %vm41 = vcmp.eq.s32.totalorder %v27, 2
  %v42 = vsel %vm40, 1, 0
  %v43 = vsel %vm41, 1, 0
  %v44 = vcvt.s32.f32 %v42
  %v45 = vcvt.s32.f32 %v43
  %vm46 = vcmp.eq.s32.totalorder %v26, 3
  %vm47 = vcmp.eq.s32.totalorder %v27, 3
  %v48 = vsel %vm46, 1, 0
  %v49 = vsel %vm47, 1, 0
  %v50 = vcvt.s32.f32 %v48
  %v51 = vcvt.s32.f32 %v49
  %v52 = vld [vmem:[%s1] sm:$0xff]
  %v53 = vld [vmem:[%s1 + $0x8] sm:$0xff]
  %v54 = vld [vmem:[%s1 + $0x10] sm:$0xff]
  %v55 = vld [vmem:[%s1 + $0x18] sm:$0xff]
  %v56 = vld [vmem:[%s1 + $0x20] sm:$0xff]
  %v57 = vld [vmem:[%s1 + $0x28] sm:$0xff]
  %v58 = vld [vmem:[%s1 + $0x30] sm:$0xff]
  %v59 = vld [vmem:[%s1 + $0x38] sm:$0xff]
  %v60 = vld [vmem:[%s1 + $0x40] sm:$0xff]
  %v61 = vld [vmem:[%s1 + $0x48] sm:$0xff]
  %v62 = vld [vmem:[%s1 + $0x50] sm:$0xff]
  %v63 = vld [vmem:[%s1 + $0x58] sm:$0xff]
  %v64 = vld [vmem:[%s1 + $0x60] sm:$0xff]
  %v65 = vld [vmem:[%s1 + $0x68] sm:$0xff]
  %v66 = vld [vmem:[%s1 + $0x70] sm:$0xff]
  %v67 = vld [vmem:[%s1 + $0x78] sm:$0xff]
  %v68 = vld [vmem:[%s1 + $0x80] sm:$0xff]
  %v69 = vld [vmem:[%s1 + $0x88] sm:$0xff]
  %v70 = vld [vmem:[%s1 + $0x90] sm:$0xff]
  %v71 = vld [vmem:[%s1 + $0x98] sm:$0xff]
  %v72 = vld [vmem:[%s1 + $0xa0] sm:$0xff]
  %v73 = vld [vmem:[%s1 + $0xa8] sm:$0xff]
  %v74 = vld [vmem:[%s1 + $0xb0] sm:$0xff]
  %v75 = vld [vmem:[%s1 + $0xb8] sm:$0xff]
  %v76 = vld [vmem:[%s1 + $0xc0] sm:$0xff]
  %v77 = vld [vmem:[%s1 + $0xc8] sm:$0xff]
  %v78 = vld [vmem:[%s1 + $0xd0] sm:$0xff]
  %v79 = vld [vmem:[%s1 + $0xd8] sm:$0xff]
  %v80 = vld [vmem:[%s1 + $0xe0] sm:$0xff]
  %v81 = vld [vmem:[%s1 + $0xe8] sm:$0xff]
  %v82 = vld [vmem:[%s1 + $0xf0] sm:$0xff]
  %v83 = vld [vmem:[%s1 + $0xf8] sm:$0xff]
  %v84 = vld [vmem:[%s1 + $0x100] sm:$0xff]
  %v85 = vld [vmem:[%s1 + $0x108] sm:$0xff]
  %v86 = vld [vmem:[%s1 + $0x110] sm:$0xff]
  %v87 = vld [vmem:[%s1 + $0x118] sm:$0xff]
  %v88 = vld [vmem:[%s1 + $0x120] sm:$0xff]
  %v89 = vld [vmem:[%s1 + $0x128] sm:$0xff]
  %v90 = vld [vmem:[%s1 + $0x130] sm:$0xff]
  %v91 = vld [vmem:[%s1 + $0x138] sm:$0xff]
  %v92 = vld [vmem:[%s1 + $0x140] sm:$0xff]
  %v93 = vld [vmem:[%s1 + $0x148] sm:$0xff]
  %v94 = vld [vmem:[%s1 + $0x150] sm:$0xff]
  %v95 = vld [vmem:[%s1 + $0x158] sm:$0xff]
  %v96 = vld [vmem:[%s1 + $0x160] sm:$0xff]
  %v97 = vld [vmem:[%s1 + $0x168] sm:$0xff]
  %v98 = vld [vmem:[%s1 + $0x170] sm:$0xff]
  %v99 = vld [vmem:[%s1 + $0x178] sm:$0xff]
  %v100 = vld [vmem:[%s1 + $0x180] sm:$0xff]
  %v101 = vld [vmem:[%s1 + $0x188] sm:$0xff]
  %v102 = vld [vmem:[%s1 + $0x190] sm:$0xff]
  %v103 = vld [vmem:[%s1 + $0x198] sm:$0xff]
  %v104 = vld [vmem:[%s1 + $0x1a0] sm:$0xff]
  %v105 = vld [vmem:[%s1 + $0x1a8] sm:$0xff]
  %v106 = vld [vmem:[%s1 + $0x1b0] sm:$0xff]
  %v107 = vld [vmem:[%s1 + $0x1b8] sm:$0xff]
  %v108 = vld [vmem:[%s1 + $0x1c0] sm:$0xff]
  %v109 = vld [vmem:[%s1 + $0x1c8] sm:$0xff]
  %v110 = vld [vmem:[%s1 + $0x1d0] sm:$0xff]
  %v111 = vld [vmem:[%s1 + $0x1d8] sm:$0xff]
  %v112 = vld [vmem:[%s1 + $0x1e0] sm:$0xff]
  %v113 = vld [vmem:[%s1 + $0x1e8] sm:$0xff]
  %v114 = vld [vmem:[%s1 + $0x1f0] sm:$0xff]
  %v115 = vld [vmem:[%s1 + $0x1f8] sm:$0xff]
  %v116 = vld [vmem:[%s1 + $0x200] sm:$0xff]
  %v117 = vld [vmem:[%s1 + $0x208] sm:$0xff]
  %v118 = vld [vmem:[%s1 + $0x210] sm:$0xff]
  %v119 = vld [vmem:[%s1 + $0x218] sm:$0xff]
  %v120 = vld [vmem:[%s1 + $0x220] sm:$0xff]
  %v121 = vld [vmem:[%s1 + $0x228] sm:$0xff]
  %v122 = vld [vmem:[%s1 + $0x230] sm:$0xff]
  %v123 = vld [vmem:[%s1 + $0x238] sm:$0xff]
  %v124 = vld [vmem:[%s1 + $0x240] sm:$0xff]
  %v125 = vld [vmem:[%s1 + $0x248] sm:$0xff]
  %v126 = vld [vmem:[%s1 + $0x250] sm:$0xff]
  %v127 = vld [vmem:[%s1 + $0x258] sm:$0xff]
  %v128 = vld [vmem:[%s1 + $0x260] sm:$0xff]
  %v129 = vld [vmem:[%s1 + $0x268] sm:$0xff]
  %v130 = vld [vmem:[%s1 + $0x270] sm:$0xff]
  %v131 = vld [vmem:[%s1 + $0x278] sm:$0xff]
  %v132 = vld [vmem:[%s1 + $0x280] sm:$0xff]
  %v133 = vld [vmem:[%s1 + $0x288] sm:$0xff]
  %v134 = vld [vmem:[%s1 + $0x290] sm:$0xff]
  %v135 = vld [vmem:[%s1 + $0x298] sm:$0xff]
  %v136 = vld [vmem:[%s1 + $0x2a0] sm:$0xff]
  %v137 = vld [vmem:[%s1 + $0x2a8] sm:$0xff]
  %v138 = vld [vmem:[%s1 + $0x2b0] sm:$0xff]
  %v139 = vld [vmem:[%s1 + $0x2b8] sm:$0xff]
  %v140 = vld [vmem:[%s1 + $0x2c0] sm:$0xff]
  %v141 = vld [vmem:[%s1 + $0x2c8] sm:$0xff]
  %v142 = vld [vmem:[%s1 + $0x2d0] sm:$0xff]
  %v143 = vld [vmem:[%s1 + $0x2d8] sm:$0xff]
  %v144 = vld [vmem:[%s1 + $0x2e0] sm:$0xff]
  %v145 = vld [vmem:[%s1 + $0x2e8] sm:$0xff]
  %v146 = vld [vmem:[%s1 + $0x2f0] sm:$0xff]
  %v147 = vld [vmem:[%s1 + $0x2f8] sm:$0xff]
  %v148 = vld [vmem:[%s1 + $0x300] sm:$0xff]
  %v149 = vld [vmem:[%s1 + $0x308] sm:$0xff]
  %v150 = vld [vmem:[%s1 + $0x310] sm:$0xff]
  %v151 = vld [vmem:[%s1 + $0x318] sm:$0xff]
  %v152 = vld [vmem:[%s1 + $0x320] sm:$0xff]
  %v153 = vld [vmem:[%s1 + $0x328] sm:$0xff]
  %v154 = vld [vmem:[%s1 + $0x330] sm:$0xff]
  %v155 = vld [vmem:[%s1 + $0x338] sm:$0xff]
  %v156 = vld [vmem:[%s1 + $0x340] sm:$0xff]
  %v157 = vld [vmem:[%s1 + $0x348] sm:$0xff]
  %v158 = vld [vmem:[%s1 + $0x350] sm:$0xff]
  %v159 = vld [vmem:[%s1 + $0x358] sm:$0xff]
  %v160 = vld [vmem:[%s1 + $0x360] sm:$0xff]
  %v161 = vld [vmem:[%s1 + $0x368] sm:$0xff]
  %v162 = vld [vmem:[%s1 + $0x370] sm:$0xff]
  %v163 = vld [vmem:[%s1 + $0x378] sm:$0xff]
  %v164 = vld [vmem:[%s1 + $0x380] sm:$0xff]
  %v165 = vld [vmem:[%s1 + $0x388] sm:$0xff]
  %v166 = vld [vmem:[%s1 + $0x390] sm:$0xff]
  %v167 = vld [vmem:[%s1 + $0x398] sm:$0xff]
  %v168 = vld [vmem:[%s1 + $0x3a0] sm:$0xff]
  %v169 = vld [vmem:[%s1 + $0x3a8] sm:$0xff]
  %v170 = vld [vmem:[%s1 + $0x3b0] sm:$0xff]
  %v171 = vld [vmem:[%s1 + $0x3b8] sm:$0xff]
  %v172 = vld [vmem:[%s1 + $0x3c0] sm:$0xff]
  %v173 = vld [vmem:[%s1 + $0x3c8] sm:$0xff]
  %v174 = vld [vmem:[%s1 + $0x3d0] sm:$0xff]
  %v175 = vld [vmem:[%s1 + $0x3d8] sm:$0xff]
  %v176 = vld [vmem:[%s1 + $0x3e0] sm:$0xff]
  %v177 = vld [vmem:[%s1 + $0x3e8] sm:$0xff]
  %v178 = vld [vmem:[%s1 + $0x3f0] sm:$0xff]
  %v179 = vld [vmem:[%s1 + $0x3f8] sm:$0xff]
  %v180 = vld [vmem:[%s2] sm:$0x1]
  %v182 = vlaneseq
  %v183 = vshrl.u32 %v182, 7
  %v184 = vsub.s32 0, %v183
  %v185 = vrot.slane %v180, %v184
  %187 = vmatprep.subr.mxu0 0.0
  %188 = vmatpush1.msra.mxu0 %v52
  %189 = vmatprep.subr.mxu0 0.0
  %190 = vmatpush1.msra.mxu0 %v53
  %191 = vmatprep.subr.mxu0 0.0
  %192 = vmatpush1.msra.mxu0 %v54
  %193 = vmatprep.subr.mxu0 0.0
  %194 = vmatpush1.msra.mxu0 %v55
  %195 = vmatprep.subr.mxu0 0.0
  %196 = vmatpush1.msra.mxu0 %v56
  %197 = vmatprep.subr.mxu0 0.0
  %198 = vmatpush1.msra.mxu0 %v57
  %199 = vmatprep.subr.mxu0 0.0
  %200 = vmatpush1.msra.mxu0 %v58
  %201 = vmatprep.subr.mxu0 0.0
  %202 = vmatpush1.msra.mxu0 %v59
  %203 = vmatprep.subr.mxu0 0.0
  %204 = vmatpush1.msra.mxu0 %v60
  %205 = vmatprep.subr.mxu0 0.0
  %206 = vmatpush1.msra.mxu0 %v61
  %207 = vmatprep.subr.mxu0 0.0
  %208 = vmatpush1.msra.mxu0 %v62
  %209 = vmatprep.subr.mxu0 0.0
  %210 = vmatpush1.msra.mxu0 %v63
  %211 = vmatprep.subr.mxu0 0.0
  %212 = vmatpush1.msra.mxu0 %v64
  %213 = vmatprep.subr.mxu0 0.0
  %214 = vmatpush1.msra.mxu0 %v65
  %215 = vmatprep.subr.mxu0 0.0
  %216 = vmatpush1.msra.mxu0 %v66
  %217 = vmatprep.subr.mxu0 0.0
  %218 = vmatpush1.msra.mxu0 %v67
  %219 = vmatprep.subr.mxu0 0.0
  %220 = vmatpush1.msra.mxu0 %v68
  %221 = vmatprep.subr.mxu0 0.0
  %222 = vmatpush1.msra.mxu0 %v69
  %223 = vmatprep.subr.mxu0 0.0
  %224 = vmatpush1.msra.mxu0 %v70
  %225 = vmatprep.subr.mxu0 0.0
  %226 = vmatpush1.msra.mxu0 %v71
  %227 = vmatprep.subr.mxu0 0.0
  %228 = vmatpush1.msra.mxu0 %v72
  %229 = vmatprep.subr.mxu0 0.0
  %230 = vmatpush1.msra.mxu0 %v73
  %231 = vmatprep.subr.mxu0 0.0
  %232 = vmatpush1.msra.mxu0 %v74
  %233 = vmatprep.subr.mxu0 0.0
  %234 = vmatpush1.msra.mxu0 %v75
  %235 = vmatprep.subr.mxu0 0.0
  %236 = vmatpush1.msra.mxu0 %v76
  %237 = vmatprep.subr.mxu0 0.0
  %238 = vmatpush1.msra.mxu0 %v77
  %239 = vmatprep.subr.mxu0 0.0
  %240 = vmatpush1.msra.mxu0 %v78
  %241 = vmatprep.subr.mxu0 0.0
  %242 = vmatpush1.msra.mxu0 %v79
  %243 = vmatprep.subr.mxu0 0.0
  %244 = vmatpush1.msra.mxu0 %v80
  %245 = vmatprep.subr.mxu0 0.0
  %246 = vmatpush1.msra.mxu0 %v81
  %247 = vmatprep.subr.mxu0 0.0
  %248 = vmatpush1.msra.mxu0 %v82
  %249 = vmatprep.subr.mxu0 0.0
  %250 = vmatpush1.msra.mxu0 %v83
  %251 = vmatprep.mubr.f32.mxu0 %v33
  %252 = vmatmul.mubr.f32.gmra.mrb[0].mxu0 %v32
  %v253 = vpop.f32.mrb[0].mxu0
  %v254 = vadd.f32 %v185, %v253
  %v255 = vpop.f32.mrb[0].mxu0
  %256 = vdwg.mxu0
  %257 = vmatprep.subr.mxu0 0.0
  %258 = vmatpush1.msra.mxu0 %v84
  %259 = vmatprep.subr.mxu0 0.0
  %260 = vmatpush1.msra.mxu0 %v85
  %261 = vmatprep.subr.mxu0 0.0
  %262 = vmatpush1.msra.mxu0 %v86
  %263 = vmatprep.subr.mxu0 0.0
  %264 = vmatpush1.msra.mxu0 %v87
  %265 = vmatprep.subr.mxu0 0.0
  %266 = vmatpush1.msra.mxu0 %v88
  %267 = vmatprep.subr.mxu0 0.0
  %268 = vmatpush1.msra.mxu0 %v89
  %269 = vmatprep.subr.mxu0 0.0
  %270 = vmatpush1.msra.mxu0 %v90
  %271 = vmatprep.subr.mxu0 0.0
  %272 = vmatpush1.msra.mxu0 %v91
  %273 = vmatprep.subr.mxu0 0.0
  %274 = vmatpush1.msra.mxu0 %v92
  %275 = vmatprep.subr.mxu0 0.0
  %276 = vmatpush1.msra.mxu0 %v93
  %277 = vmatprep.subr.mxu0 0.0
  %278 = vmatpush1.msra.mxu0 %v94
  %279 = vmatprep.subr.mxu0 0.0
  %280 = vmatpush1.msra.mxu0 %v95
  %281 = vmatprep.subr.mxu0 0.0
  %282 = vmatpush1.msra.mxu0 %v96
  %283 = vmatprep.subr.mxu0 0.0
  %284 = vmatpush1.msra.mxu0 %v97
  %285 = vmatprep.subr.mxu0 0.0
  %286 = vmatpush1.msra.mxu0 %v98
  %287 = vmatprep.subr.mxu0 0.0
  %288 = vmatpush1.msra.mxu0 %v99
  %289 = vmatprep.subr.mxu0 0.0
  %290 = vmatpush1.msra.mxu0 %v100
  %291 = vmatprep.subr.mxu0 0.0
  %292 = vmatpush1.msra.mxu0 %v101
  %293 = vmatprep.subr.mxu0 0.0
  %294 = vmatpush1.msra.mxu0 %v102
  %295 = vmatprep.subr.mxu0 0.0
  %296 = vmatpush1.msra.mxu0 %v103
  %297 = vmatprep.subr.mxu0 0.0
  %298 = vmatpush1.msra.mxu0 %v104
  %299 = vmatprep.subr.mxu0 0.0
  %300 = vmatpush1.msra.mxu0 %v105
  %301 = vmatprep.subr.mxu0 0.0
  %302 = vmatpush1.msra.mxu0 %v106
  %303 = vmatprep.subr.mxu0 0.0
  %304 = vmatpush1.msra.mxu0 %v107
  %305 = vmatprep.subr.mxu0 0.0
  %306 = vmatpush1.msra.mxu0 %v108
  %307 = vmatprep.subr.mxu0 0.0
  %308 = vmatpush1.msra.mxu0 %v109
  %309 = vmatprep.subr.mxu0 0.0
  %310 = vmatpush1.msra.mxu0 %v110
  %311 = vmatprep.subr.mxu0 0.0
  %312 = vmatpush1.msra.mxu0 %v111
  %313 = vmatprep.subr.mxu0 0.0
  %314 = vmatpush1.msra.mxu0 %v112
  %315 = vmatprep.subr.mxu0 0.0
  %316 = vmatpush1.msra.mxu0 %v113
  %317 = vmatprep.subr.mxu0 0.0
  %318 = vmatpush1.msra.mxu0 %v114
  %319 = vmatprep.subr.mxu0 0.0
  %320 = vmatpush1.msra.mxu0 %v115
  %321 = vmatprep.mubr.f32.mxu0 %v39
  %322 = vmatmul.mubr.f32.gmra.mrb[0].mxu0 %v38
  %v323 = vpop.f32.mrb[0].mxu0
  %v324 = vadd.f32 %v254, %v323
  %v325 = vpop.f32.mrb[0].mxu0
  %326 = vdwg.mxu0
  %327 = vmatprep.subr.mxu0 0.0
  %328 = vmatpush1.msra.mxu0 %v116
  %329 = vmatprep.subr.mxu0 0.0
  %330 = vmatpush1.msra.mxu0 %v117
  %331 = vmatprep.subr.mxu0 0.0
  %332 = vmatpush1.msra.mxu0 %v118
  %333 = vmatprep.subr.mxu0 0.0
  %334 = vmatpush1.msra.mxu0 %v119
  %335 = vmatprep.subr.mxu0 0.0
  %336 = vmatpush1.msra.mxu0 %v120
  %337 = vmatprep.subr.mxu0 0.0
  %338 = vmatpush1.msra.mxu0 %v121
  %339 = vmatprep.subr.mxu0 0.0
  %340 = vmatpush1.msra.mxu0 %v122
  %341 = vmatprep.subr.mxu0 0.0
  %342 = vmatpush1.msra.mxu0 %v123
  %343 = vmatprep.subr.mxu0 0.0
  %344 = vmatpush1.msra.mxu0 %v124
  %345 = vmatprep.subr.mxu0 0.0
  %346 = vmatpush1.msra.mxu0 %v125
  %347 = vmatprep.subr.mxu0 0.0
  %348 = vmatpush1.msra.mxu0 %v126
  %349 = vmatprep.subr.mxu0 0.0
  %350 = vmatpush1.msra.mxu0 %v127
  %351 = vmatprep.subr.mxu0 0.0
  %352 = vmatpush1.msra.mxu0 %v128
  %353 = vmatprep.subr.mxu0 0.0
  %354 = vmatpush1.msra.mxu0 %v129
  %355 = vmatprep.subr.mxu0 0.0
  %356 = vmatpush1.msra.mxu0 %v130
  %357 = vmatprep.subr.mxu0 0.0
  %358 = vmatpush1.msra.mxu0 %v131
  %359 = vmatprep.subr.mxu0 0.0
  %360 = vmatpush1.msra.mxu0 %v132
  %361 = vmatprep.subr.mxu0 0.0
  %362 = vmatpush1.msra.mxu0 %v133
  %363 = vmatprep.subr.mxu0 0.0
  %364 = vmatpush1.msra.mxu0 %v134
  %365 = vmatprep.subr.mxu0 0.0
  %366 = vmatpush1.msra.mxu0 %v135
  %367 = vmatprep.subr.mxu0 0.0
  %368 = vmatpush1.msra.mxu0 %v136
  %369 = vmatprep.subr.mxu0 0.0
  %370 = vmatpush1.msra.mxu0 %v137
  %371 = vmatprep.subr.mxu0 0.0
  %372 = vmatpush1.msra.mxu0 %v138
  %373 = vmatprep.subr.mxu0 0.0
  %374 = vmatpush1.msra.mxu0 %v139
  %375 = vmatprep.subr.mxu0 0.0
  %376 = vmatpush1.msra.mxu0 %v140
  %377 = vmatprep.subr.mxu0 0.0
  %378 = vmatpush1.msra.mxu0 %v141
  %379 = vmatprep.subr.mxu0 0.0
  %380 = vmatpush1.msra.mxu0 %v142
  %381 = vmatprep.subr.mxu0 0.0
  %382 = vmatpush1.msra.mxu0 %v143
  %383 = vmatprep.subr.mxu0 0.0
  %384 = vmatpush1.msra.mxu0 %v144
  %385 = vmatprep.subr.mxu0 0.0
  %386 = vmatpush1.msra.mxu0 %v145
  %387 = vmatprep.subr.mxu0 0.0
  %388 = vmatpush1.msra.mxu0 %v146
  %389 = vmatprep.subr.mxu0 0.0
  %390 = vmatpush1.msra.mxu0 %v147
  %391 = vmatprep.mubr.f32.mxu0 %v45
  %392 = vmatmul.mubr.f32.gmra.mrb[0].mxu0 %v44
  %v393 = vpop.f32.mrb[0].mxu0
  %v394 = vadd.f32 %v324, %v393
  %v395 = vpop.f32.mrb[0].mxu0
  %396 = vdwg.mxu0
  %397 = vmatprep.subr.mxu0 0.0
  %398 = vmatpush1.msra.mxu0 %v148
  %399 = vmatprep.subr.mxu0 0.0
  %400 = vmatpush1.msra.mxu0 %v149
  %401 = vmatprep.subr.mxu0 0.0
  %402 = vmatpush1.msra.mxu0 %v150
  %403 = vmatprep.subr.mxu0 0.0
  %404 = vmatpush1.msra.mxu0 %v151
  %405 = vmatprep.subr.mxu0 0.0
  %406 = vmatpush1.msra.mxu0 %v152
  %407 = vmatprep.subr.mxu0 0.0
  %408 = vmatpush1.msra.mxu0 %v153
  %409 = vmatprep.subr.mxu0 0.0
  %410 = vmatpush1.msra.mxu0 %v154
  %411 = vmatprep.subr.mxu0 0.0
  %412 = vmatpush1.msra.mxu0 %v155
  %413 = vmatprep.subr.mxu0 0.0
  %414 = vmatpush1.msra.mxu0 %v156
  %415 = vmatprep.subr.mxu0 0.0
  %416 = vmatpush1.msra.mxu0 %v157
  %417 = vmatprep.subr.mxu0 0.0
  %418 = vmatpush1.msra.mxu0 %v158
  %419 = vmatprep.subr.mxu0 0.0
  %420 = vmatpush1.msra.mxu0 %v159
  %421 = vmatprep.subr.mxu0 0.0
  %422 = vmatpush1.msra.mxu0 %v160
  %423 = vmatprep.subr.mxu0 0.0
  %424 = vmatpush1.msra.mxu0 %v161
  %425 = vmatprep.subr.mxu0 0.0
  %426 = vmatpush1.msra.mxu0 %v162
  %427 = vmatprep.subr.mxu0 0.0
  %428 = vmatpush1.msra.mxu0 %v163
  %429 = vmatprep.subr.mxu0 0.0
  %430 = vmatpush1.msra.mxu0 %v164
  %431 = vmatprep.subr.mxu0 0.0
  %432 = vmatpush1.msra.mxu0 %v165
  %433 = vmatprep.subr.mxu0 0.0
  %434 = vmatpush1.msra.mxu0 %v166
  %435 = vmatprep.subr.mxu0 0.0
  %436 = vmatpush1.msra.mxu0 %v167
  %437 = vmatprep.subr.mxu0 0.0
  %438 = vmatpush1.msra.mxu0 %v168
  %439 = vmatprep.subr.mxu0 0.0
  %440 = vmatpush1.msra.mxu0 %v169
  %441 = vmatprep.subr.mxu0 0.0
  %442 = vmatpush1.msra.mxu0 %v170
  %443 = vmatprep.subr.mxu0 0.0
  %444 = vmatpush1.msra.mxu0 %v171
  %445 = vmatprep.subr.mxu0 0.0
  %446 = vmatpush1.msra.mxu0 %v172
  %447 = vmatprep.subr.mxu0 0.0
  %448 = vmatpush1.msra.mxu0 %v173
  %449 = vmatprep.subr.mxu0 0.0
  %450 = vmatpush1.msra.mxu0 %v174
  %451 = vmatprep.subr.mxu0 0.0
  %452 = vmatpush1.msra.mxu0 %v175
  %453 = vmatprep.subr.mxu0 0.0
  %454 = vmatpush1.msra.mxu0 %v176
  %455 = vmatprep.subr.mxu0 0.0
  %456 = vmatpush1.msra.mxu0 %v177
  %457 = vmatprep.subr.mxu0 0.0
  %458 = vmatpush1.msra.mxu0 %v178
  %459 = vmatprep.subr.mxu0 0.0
  %460 = vmatpush1.msra.mxu0 %v179
  %461 = vmatprep.mubr.f32.mxu0 %v51
  %462 = vmatmul.mubr.f32.gmra.mrb[0].mxu0 %v50
  %v463 = vpop.f32.mrb[0].mxu0
  %v464 = vadd.f32 %v394, %v463
  %v465 = vpop.f32.mrb[0].mxu0
  %466 = vdwg.mxu0
  %v467 = vmax.f32 %v464, 0.0
  %v468 = vld [vmem:[%s3] sm:$0xff]
  %v469 = vld [vmem:[%s3 + $0x8] sm:$0xff]
  %v470 = vld [vmem:[%s3 + $0x10] sm:$0xff]
  %v471 = vld [vmem:[%s3 + $0x18] sm:$0xff]
  %v472 = vld [vmem:[%s3 + $0x20] sm:$0xff]
  %v473 = vld [vmem:[%s3 + $0x28] sm:$0xff]
  %v474 = vld [vmem:[%s3 + $0x30] sm:$0xff]
  %v475 = vld [vmem:[%s3 + $0x38] sm:$0xff]
  %v476 = vld [vmem:[%s3 + $0x40] sm:$0xff]
  %v477 = vld [vmem:[%s3 + $0x48] sm:$0xff]
  %v478 = vld [vmem:[%s3 + $0x50] sm:$0xff]
  %v479 = vld [vmem:[%s3 + $0x58] sm:$0xff]
  %v480 = vld [vmem:[%s3 + $0x60] sm:$0xff]
  %v481 = vld [vmem:[%s3 + $0x68] sm:$0xff]
  %v482 = vld [vmem:[%s3 + $0x70] sm:$0xff]
  %v483 = vld [vmem:[%s3 + $0x78] sm:$0xff]
  %v484 = vld [vmem:[%s4] sm:$0x1]
  %v486 = vlaneseq
  %v487 = vshrl.u32 %v486, 7
  %v488 = vsub.s32 0, %v487
  %v489 = vrot.slane %v484, %v488
  %491 = vmatprep.subr.mxu0 0.0
  %492 = vmatpush1.msra.mxu0 %v468
  %493 = vmatprep.subr.mxu0 0.0
  %494 = vmatpush1.msra.mxu0 %v469
  %495 = vmatprep.subr.mxu0 0.0
  %496 = vmatpush1.msra.mxu0 %v470
  %497 = vmatprep.subr.mxu0 0.0
  %498 = vmatpush1.msra.mxu0 %v471
  %499 = vmatprep.subr.mxu0 0.0
  %500 = vmatpush1.msra.mxu0 %v472
  %501 = vmatprep.subr.mxu0 0.0
  %502 = vmatpush1.msra.mxu0 %v473
  %503 = vmatprep.subr.mxu0 0.0
  %504 = vmatpush1.msra.mxu0 %v474
  %505 = vmatprep.subr.mxu0 0.0
  %506 = vmatpush1.msra.mxu0 %v475
  %507 = vmatprep.subr.mxu0 0.0
  %508 = vmatpush1.msra.mxu0 %v476
  %509 = vmatprep.subr.mxu0 0.0
  %510 = vmatpush1.msra.mxu0 %v477
  %511 = vmatprep.subr.mxu0 0.0
  %512 = vmatpush1.msra.mxu0 %v478
  %513 = vmatprep.subr.mxu0 0.0
  %514 = vmatpush1.msra.mxu0 %v479
  %515 = vmatprep.subr.mxu0 0.0
  %516 = vmatpush1.msra.mxu0 %v480
  %517 = vmatprep.subr.mxu0 0.0
  %518 = vmatpush1.msra.mxu0 %v481
  %519 = vmatprep.subr.mxu0 0.0
  %520 = vmatpush1.msra.mxu0 %v482
  %521 = vmatprep.subr.mxu0 0.0
  %522 = vmatpush1.msra.mxu0 %v483
  %523 = vmatprep.subr.mxu0 0.0
  %524 = vmatpush1.msra.mxu0 0.0
  %525 = vmatprep.subr.mxu0 0.0
  %526 = vmatpush1.msra.mxu0 0.0
  %527 = vmatprep.subr.mxu0 0.0
  %528 = vmatpush1.msra.mxu0 0.0
  %529 = vmatprep.subr.mxu0 0.0
  %530 = vmatpush1.msra.mxu0 0.0
  %531 = vmatprep.subr.mxu0 0.0
  %532 = vmatpush1.msra.mxu0 0.0
  %533 = vmatprep.subr.mxu0 0.0
  %534 = vmatpush1.msra.mxu0 0.0
  %535 = vmatprep.subr.mxu0 0.0
  %536 = vmatpush1.msra.mxu0 0.0
  %537 = vmatprep.subr.mxu0 0.0
  %538 = vmatpush1.msra.mxu0 0.0
  %539 = vmatprep.subr.mxu0 0.0
  %540 = vmatpush1.msra.mxu0 0.0
  %541 = vmatprep.subr.mxu0 0.0
  %542 = vmatpush1.msra.mxu0 0.0
  %543 = vmatprep.subr.mxu0 0.0
  %544 = vmatpush1.msra.mxu0 0.0
  %545 = vmatprep.subr.mxu0 0.0
  %546 = vmatpush1.msra.mxu0 0.0
  %547 = vmatprep.subr.mxu0 0.0
  %548 = vmatpush1.msra.mxu0 0.0
  %549 = vmatprep.subr.mxu0 0.0
  %550 = vmatpush1.msra.mxu0 0.0
  %551 = vmatprep.subr.mxu0 0.0
  %552 = vmatpush1.msra.mxu0 0.0
  %553 = vmatprep.subr.mxu0 0.0
  %554 = vmatpush1.msra.mxu0 0.0
  %555 = vmatprep.mubr.f32.mxu0 0.0
  %556 = vmatmul.mubr.f32.gmra.mrb[0].mxu0 %v467
  %v557 = vpop.f32.mrb[0].mxu0
  %v558 = vadd.f32 %v489, %v557
  %v559 = vpop.f32.mrb[0].mxu0
  %560 = vdwg.mxu0
  %v561 = vld [vmem:[%s5] sm:$0xff]
  %v562 = vld [vmem:[%s5 + $0x8] sm:$0xff]
  %v563 = vld [vmem:[%s5 + $0x10] sm:$0xff]
  %v564 = vld [vmem:[%s5 + $0x18] sm:$0xff]
  %v565 = vld [vmem:[%s5 + $0x20] sm:$0xff]
  %v566 = vld [vmem:[%s5 + $0x28] sm:$0xff]
  %v567 = vld [vmem:[%s5 + $0x30] sm:$0xff]
  %v568 = vld [vmem:[%s5 + $0x38] sm:$0xff]
  %v569 = vld [vmem:[%s5 + $0x40] sm:$0xff]
  %v570 = vld [vmem:[%s5 + $0x48] sm:$0xff]
  %v571 = vld [vmem:[%s5 + $0x50] sm:$0xff]
  %v572 = vld [vmem:[%s5 + $0x58] sm:$0xff]
  %v573 = vld [vmem:[%s5 + $0x60] sm:$0xff]
  %v574 = vld [vmem:[%s5 + $0x68] sm:$0xff]
  %v575 = vld [vmem:[%s5 + $0x70] sm:$0xff]
  %v576 = vld [vmem:[%s5 + $0x78] sm:$0xff]
  %v577 = vld [vmem:[%s6] sm:$0x1]
  %v579 = vlaneseq
  %v580 = vshrl.u32 %v579, 7
  %v581 = vsub.s32 0, %v580
  %v582 = vrot.slane %v577, %v581
  %584 = vmatprep.subr.mxu0 0.0
  %585 = vmatpush1.msra.mxu0 %v561
  %586 = vmatprep.subr.mxu0 0.0
  %587 = vmatpush1.msra.mxu0 %v562
  %588 = vmatprep.subr.mxu0 0.0
  %589 = vmatpush1.msra.mxu0 %v563
  %590 = vmatprep.subr.mxu0 0.0
  %591 = vmatpush1.msra.mxu0 %v564
  %592 = vmatprep.subr.mxu0 0.0
  %593 = vmatpush1.msra.mxu0 %v565
  %594 = vmatprep.subr.mxu0 0.0
  %595 = vmatpush1.msra.mxu0 %v566
  %596 = vmatprep.subr.mxu0 0.0
  %597 = vmatpush1.msra.mxu0 %v567
  %598 = vmatprep.subr.mxu0 0.0
  %599 = vmatpush1.msra.mxu0 %v568
  %600 = vmatprep.subr.mxu0 0.0
  %601 = vmatpush1.msra.mxu0 %v569
  %602 = vmatprep.subr.mxu0 0.0
  %603 = vmatpush1.msra.mxu0 %v570
  %604 = vmatprep.subr.mxu0 0.0
  %605 = vmatpush1.msra.mxu0 %v571
  %606 = vmatprep.subr.mxu0 0.0
  %607 = vmatpush1.msra.mxu0 %v572
  %608 = vmatprep.subr.mxu0 0.0
  %609 = vmatpush1.msra.mxu0 %v573
  %610 = vmatprep.subr.mxu0 0.0
  %611 = vmatpush1.msra.mxu0 %v574
  %612 = vmatprep.subr.mxu0 0.0
  %613 = vmatpush1.msra.mxu0 %v575
  %614 = vmatprep.subr.mxu0 0.0
  %615 = vmatpush1.msra.mxu0 %v576
  %616 = vmatprep.subr.mxu0 0.0
  %617 = vmatpush1.msra.mxu0 0.0
  %618 = vmatprep.subr.mxu0 0.0
  %619 = vmatpush1.msra.mxu0 0.0
  %620 = vmatprep.subr.mxu0 0.0
  %621 = vmatpush1.msra.mxu0 0.0
  %622 = vmatprep.subr.mxu0 0.0
  %623 = vmatpush1.msra.mxu0 0.0
  %624 = vmatprep.subr.mxu0 0.0
  %625 = vmatpush1.msra.mxu0 0.0
  %626 = vmatprep.subr.mxu0 0.0
  %627 = vmatpush1.msra.mxu0 0.0
  %628 = vmatprep.subr.mxu0 0.0
  %629 = vmatpush1.msra.mxu0 0.0
  %630 = vmatprep.subr.mxu0 0.0
  %631 = vmatpush1.msra.mxu0 0.0
  %632 = vmatprep.subr.mxu0 0.0
  %633 = vmatpush1.msra.mxu0 0.0
  %634 = vmatprep.subr.mxu0 0.0
  %635 = vmatpush1.msra.mxu0 0.0
  %636 = vmatprep.subr.mxu0 0.0
  %637 = vmatpush1.msra.mxu0 0.0
  %638 = vmatprep.subr.mxu0 0.0
  %639 = vmatpush1.msra.mxu0 0.0
  %640 = vmatprep.subr.mxu0 0.0
  %641 = vmatpush1.msra.mxu0 0.0
  %642 = vmatprep.subr.mxu0 0.0
  %643 = vmatpush1.msra.mxu0 0.0
  %644 = vmatprep.subr.mxu0 0.0
  %645 = vmatpush1.msra.mxu0 0.0
  %646 = vmatprep.subr.mxu0 0.0
  %647 = vmatpush1.msra.mxu0 0.0
  %648 = vmatprep.mubr.f32.mxu0 0.0
  %649 = vmatmul.mubr.f32.gmra.mrb[0].mxu0 %v558
  %v650 = vpop.f32.mrb[0].mxu0
  %v651 = vadd.f32 %v582, %v650
  %v652 = vpop.f32.mrb[0].mxu0
  %653 = vdwg.mxu0
  %v654 = vlaneseq
  %v655 = vand.u32 %v654, 127
  %vm656 = vcmp.lt.s32.totalorder %v655, 6
  %v657 = vsel %vm656, %v651, -1e+30
  %658 = vmax.xlane.f32.xlu0 %v657
  %v659 = vpop.xlane.xlu0 %658
  %v660 = vsub.f32 %v657, %v659
  %v661 = vmul.f32 %v660, 1.442695
  %v662 = vpow.pop %v661
  %663 = vadd.xlane.f32.xlu0 %v662
  %v664 = vpop.xlane.xlu0 %663
  %v665 = vrcp.pop %v664
  %v666 = vmul.f32 %v662, %v665
  %v667 = vsel %vm656, %v666, %v651
  %668 = vst [vmem:[%s7] sm:$0xff] %v667
  // Predicated region
  $region30: #{actor_critic_forward.1} parent=0 // pred_check
    _
  $region31: #{actor_critic_forward.1} parent=0 // pred_check_branch
    %670 = sbr.rel (0) target = $region33
  $region32: #{actor_critic_forward.1} parent=0 // pred_region
    _
  $region33: #{actor_critic_forward.1} parent=0 // pred_fallthru
    _
  // Predicated region
  $region34: #{actor_critic_forward.1} parent=0 // pred_check
    _
  $region35: #{actor_critic_forward.1} parent=0 // pred_check_branch
    %672 = sbr.rel (0) target = $region37
  $region36: #{actor_critic_forward.1} parent=0 // pred_region
    _
  $region37: #{actor_critic_forward.1} parent=0 // pred_fallthru
    _

</llo_original>
